<compile_context>
chip_gen: v5e
topology: v5e:2x2
jax: 0.10.0
libtpu: 0.0.40
codegen_flags: <defaults>
</compile_context>

<pallas_src>
import functools

import jax
import jax.numpy as jnp
from jax.experimental import pallas as pl
from jax.experimental.pallas import tpu as pltpu


# ---------------------------------------------------------------------------
# Kernels
# ---------------------------------------------------------------------------

def _ln_fused_kernel(x_ref, gamma_ref, beta_ref, o_ref, *, eps, inv_n, inv_nm1):
    """Single-shot LayerNorm for a block of whole samples.

    x_ref:     (B, R, L)   R = C*fold sublanes, L = HW//fold lanes (full sample)
    gamma_ref: (R, 1)      per-channel gamma, each channel repeated `fold` times
    beta_ref:  (R, 1)
    """
    x = x_ref[...].astype(jnp.float32)

    # Two-pass statistics over VMEM-resident data (no cancellation, no extra HBM
    # traffic): lane-reduce (XLU) then a tiny partial reduce per sample.
    s1 = jnp.sum(jnp.sum(x, axis=2, keepdims=True), axis=1, keepdims=True)  # (B,1,1)
    mean = s1 * inv_n
    d = x - mean
    m2 = jnp.sum(jnp.sum(d * d, axis=2, keepdims=True), axis=1, keepdims=True)
    var = jnp.maximum(m2 * inv_nm1, 0.0)          # unbiased: divide by N-1
    inv = 1.0 / (jnp.sqrt(var) + eps)             # module semantics: eps added to std

    g = gamma_ref[...].astype(jnp.float32)[None, :, :]   # (1, R, 1)
    b = beta_ref[...].astype(jnp.float32)[None, :, :]
    # Fused normalize + affine: one FMA over the tile.
    o_ref[...] = (d * (g * inv) + b).astype(o_ref.dtype)


def _ln_stats_kernel(x_ref, mean_ref, m2_ref, *, T, Lf, R):
    """Streaming per-sample mean / M2 over lane chunks (Chan parallel combine).

    x_ref: (Nb, R, T) chunk.  mean_ref / m2_ref: (Nb, 1, 1) resident accumulators
    (output block index is constant over the chunk axis).
    """
    k = pl.program_id(1)

    @pl.when(k == 0)
    def _():
        mean_ref[...] = jnp.zeros_like(mean_ref)
        m2_ref[...] = jnp.zeros_like(m2_ref)

    x = x_ref[...].astype(jnp.float32)
    ragged = (Lf % T) != 0                        # static: does the last chunk overrun?
    if ragged:
        lane = jax.lax.broadcasted_iota(jnp.int32, x.shape, 2)
        n_valid = jnp.minimum(Lf - k * T, T)      # valid lanes in this chunk
        mask = lane < n_valid
        xs = jnp.where(mask, x, 0.0)
        nc = (n_valid * R).astype(jnp.float32)    # valid elements / sample this chunk
    else:
        mask = None
        xs = x
        nc = jnp.float32(T * R)

    c_sum = jnp.sum(jnp.sum(xs, axis=2, keepdims=True), axis=1, keepdims=True)
    c_mean = c_sum / nc                           # (Nb, 1, 1)
    d = x - c_mean
    if ragged:
        d = jnp.where(mask, d, 0.0)
    c_m2 = jnp.sum(jnp.sum(d * d, axis=2, keepdims=True), axis=1, keepdims=True)

    # Chan et al. combine of running (count, mean, M2) with this chunk's stats.
    # All chunks before k are full, so count_old = k * T * R.
    count_old = k.astype(jnp.float32) * jnp.float32(T * R)
    tot = count_old + nc
    w = nc / tot
    m_old = mean_ref[...]
    delta = c_mean - m_old
    mean_ref[...] = m_old + delta * w
    m2_ref[...] = m2_ref[...] + c_m2 + (delta * delta) * (count_old * w)


def _ln_apply_kernel(x_ref, mean_ref, m2_ref, gamma_ref, beta_ref, o_ref,
                     *, eps, inv_nm1):
    """y = (x - mean)/(std + eps) * gamma + beta as one scale/shift FMA per chunk."""
    x = x_ref[...].astype(jnp.float32)                    # (Nb, R, T)
    mean = mean_ref[...]                                  # (Nb, 1, 1)
    var = jnp.maximum(m2_ref[...] * inv_nm1, 0.0)
    inv = 1.0 / (jnp.sqrt(var) + eps)
    g = gamma_ref[...].astype(jnp.float32)[None, :, :]    # (1, R, 1)
    b = beta_ref[...].astype(jnp.float32)[None, :, :]
    scale = g * inv                                       # (Nb, R, 1)
    shift = b - mean * scale
    o_ref[...] = (x * scale + shift).astype(o_ref.dtype)


# ---------------------------------------------------------------------------
# Tiling / budgeting helpers
# ---------------------------------------------------------------------------

def _choose_fold(C, HW):
    """Smallest f | HW with (C*f) % 8 == 0 and (HW//f) % 128 == 0 (else 1).

    Folding part of HW into the sublane axis removes sublane padding when C is
    not a multiple of 8 (e.g. C=4, HW=256 -> (8, 128): exactly one vreg per row).
    """
    if C % 8 == 0 and HW % 128 == 0:
        return 1
    for f in range(1, max(HW // 128, 1) + 1):
        if HW % f == 0 and (HW // f) % 128 == 0 and (C * f) % 8 == 0:
            return f
    return 1


def _padded_elems(rows, lanes):
    """Element count of the (8,128)-padded vreg/VMEM footprint of a (rows, lanes) tile."""
    return ((rows + 7) // 8 * 8) * ((lanes + 127) // 128 * 128)


def _vmem_budget(itemsize):
    """(max block bytes, scoped vmem limit) derived from the chip's physical VMEM."""
    try:
        cap = int(pltpu.get_tpu_info().vmem_capacity_bytes)  # 128 MiB v5e/v6e, 64 MiB v7x
    except Exception:
        cap = 64 * 1024 * 1024                               # conservative default
    vmem_limit = min(cap * 3 // 4, 100 * 1024 * 1024)
    # Residency ~= 2x(in) + 2x(out) double-buffered blocks + ~2 f32-sized temporaries.
    max_block = (vmem_limit * itemsize) // (4 * itemsize + 8)
    return int(max_block), int(vmem_limit)


# ---------------------------------------------------------------------------
# Wrappers
# ---------------------------------------------------------------------------

def _layer_norm_packed(x3, gamma2, beta2, eps, per_sample_vmem,
                       max_block_bytes, vmem_limit_bytes):
    """Whole samples per grid step: one HBM read + one write, single fused kernel."""
    N, R, L = x3.shape
    n_elems = R * L
    itemsize = jnp.dtype(x3.dtype).itemsize

    B = max(1, min(N, max_block_bytes // per_sample_vmem))
    if N >= 2:
        B = min(B, pl.cdiv(N, 2))      # >= 2 grid steps so both v7x cores get work
    n_tiles = pl.cdiv(N, B)            # ragged tail rows are dropped on writeback

    kernel = functools.partial(
        _ln_fused_kernel, eps=float(eps),
        inv_n=1.0 / n_elems, inv_nm1=1.0 / max(n_elems - 1, 1))

    cost = pl.CostEstimate(
        flops=int(7 * N * n_elems),
        transcendentals=int(N),
        bytes_accessed=int(2 * N * n_elems * itemsize + 2 * R * 4))

    return pl.pallas_call(
        kernel,
        out_shape=jax.ShapeDtypeStruct((N, R, L), x3.dtype),
        grid_spec=pltpu.PrefetchScalarGridSpec(
            num_scalar_prefetch=0,
            grid=(n_tiles,),
            in_specs=[
                pl.BlockSpec((B, R, L), lambda i: (i, 0, 0)),
                pl.BlockSpec((R, 1), lambda i: (0, 0)),
                pl.BlockSpec((R, 1), lambda i: (0, 0)),
            ],
            out_specs=pl.BlockSpec((B, R, L), lambda i: (i, 0, 0)),
        ),
        compiler_params=pltpu.CompilerParams(
            dimension_semantics=("parallel",),
            vmem_limit_bytes=vmem_limit_bytes,
        ),
        cost_estimate=cost,
    )(x3, gamma2, beta2)


def _layer_norm_chunked(x3, gamma2, beta2, eps, max_block_bytes, vmem_limit_bytes):
    """Large samples: (batch-tiles x lane-chunks) stats pass + fused apply pass."""
    N, R, Lf = x3.shape
    n_elems = R * Lf
    itemsize = jnp.dtype(x3.dtype).itemsize
    R_pad = (R + 7) // 8 * 8

    # Lane chunk: as wide as the budget allows (long DMA segments); prefer an exact
    # divisor of Lf, otherwise take the widest chunk and mask the ragged tail.
    # TODO(synk): if R alone is so large that a single 128-lane chunk exceeds the
    # budget (>~16K folded channels) this over-allocates; tile R too in that case.
    t_cap = max(128, (max_block_bytes // (R_pad * itemsize)) // 128 * 128)
    t_cap = min(t_cap, pl.cdiv(Lf, 128) * 128)
    t_div = 0
    t = 128
    while t <= t_cap:
        if Lf % t == 0:
            t_div = t
        t += 128
    T = t_div if t_div >= min(t_cap, 512) else t_cap
    K = pl.cdiv(Lf, T)

    Nb = max(1, min(N, max_block_bytes // (R_pad * T * itemsize)))
    if N >= 2:
        Nb = min(Nb, pl.cdiv(N, 2))    # >= 2 batch tiles -> v7x megacore on both passes
    n_tiles = pl.cdiv(N, Nb)

    # Pass 1: streaming per-sample mean / M2 (Chan combine) over lane chunks.
    stats_kernel = functools.partial(_ln_stats_kernel, T=T, Lf=Lf, R=R)
    mean_acc, m2_acc = pl.pallas_call(
        stats_kernel,
        out_shape=(jax.ShapeDtypeStruct((N, 1, 1), jnp.float32),
                   jax.ShapeDtypeStruct((N, 1, 1), jnp.float32)),
        grid_spec=pltpu.PrefetchScalarGridSpec(
            num_scalar_prefetch=0,
            grid=(n_tiles, K),
            in_specs=[pl.BlockSpec((Nb, R, T), lambda n, k: (n, 0, k))],
            out_specs=(pl.BlockSpec((Nb, 1, 1), lambda n, k: (n, 0, 0)),
                       pl.BlockSpec((Nb, 1, 1), lambda n, k: (n, 0, 0))),
        ),
        compiler_params=pltpu.CompilerParams(
            dimension_semantics=("parallel", "arbitrary"),
            vmem_limit_bytes=vmem_limit_bytes,
        ),
        cost_estimate=pl.CostEstimate(
            flops=int(5 * N * n_elems), transcendentals=0,
            bytes_accessed=int(N * n_elems * itemsize)),
    )(x3)

    # Pass 2: y = x*scale + shift; normalization constants derived in-kernel from the
    # (N,1,1) accumulators + (R,1) gamma/beta -- no (N,C,1) scale/shift round trip.
    apply_kernel = functools.partial(
        _ln_apply_kernel, eps=float(eps), inv_nm1=1.0 / max(n_elems - 1, 1))
    out = pl.pallas_call(
        apply_kernel,
        out_shape=jax.ShapeDtypeStruct((N, R, Lf), x3.dtype),
        grid_spec=pltpu.PrefetchScalarGridSpec(
            num_scalar_prefetch=0,
            grid=(n_tiles, K),
            in_specs=[
                pl.BlockSpec((Nb, R, T), lambda n, k: (n, 0, k)),
                pl.BlockSpec((Nb, 1, 1), lambda n, k: (n, 0, 0)),
                pl.BlockSpec((Nb, 1, 1), lambda n, k: (n, 0, 0)),
                pl.BlockSpec((R, 1), lambda n, k: (0, 0)),
                pl.BlockSpec((R, 1), lambda n, k: (0, 0)),
            ],
            out_specs=pl.BlockSpec((Nb, R, T), lambda n, k: (n, 0, k)),
        ),
        compiler_params=pltpu.CompilerParams(
            dimension_semantics=("parallel", "parallel"),
            vmem_limit_bytes=vmem_limit_bytes,
        ),
        cost_estimate=pl.CostEstimate(
            flops=int(2 * N * n_elems), transcendentals=int(N),
            bytes_accessed=int(2 * N * n_elems * itemsize)),
    )(x3, mean_acc, m2_acc, gamma2, beta2)
    return out


def layer_norm(x, gamma, beta, eps=1e-5, *,
               max_block_bytes=None, vmem_limit_bytes=None):
    """LayerNorm matching the PyTorch module.  x: (N, C, H, W); gamma/beta: (C,)."""
    N, C, H, W = x.shape
    HW = H * W
    itemsize = jnp.dtype(x.dtype).itemsize

    auto_block, auto_limit = _vmem_budget(itemsize)
    if max_block_bytes is None:
        max_block_bytes = auto_block
    if vmem_limit_bytes is None:
        vmem_limit_bytes = auto_limit

    # Sublane fold: when C % 8 != 0, move part of HW onto the sublane axis so vregs
    # and VMEM rows are fully used (e.g. C=4, HW=256 -> rows of (8, 128)).
    fold = _choose_fold(C, HW)
    R, L = C * fold, HW // fold
    x3 = x.reshape(N, R, L)                                  # contiguous reshape: free
    gamma2 = jnp.repeat(gamma.astype(jnp.float32), fold).reshape(R, 1)
    beta2 = jnp.repeat(beta.astype(jnp.float32), fold).reshape(R, 1)

    per_sample_vmem = _padded_elems(R, L) * itemsize         # (8,128)-padded footprint
    if per_sample_vmem <= max_block_bytes:
        out3 = _layer_norm_packed(x3, gamma2, beta2, eps, per_sample_vmem,
                                  max_block_bytes, vmem_limit_bytes)
    else:
        out3 = _layer_norm_chunked(x3, gamma2, beta2, eps,
                                   max_block_bytes, vmem_limit_bytes)
    return out3.reshape(N, C, H, W)


def layer_norm_ref(x, gamma, beta, eps=1e-5):
    """Pure-JAX two-pass reference mirroring the PyTorch forward."""
    N = x.shape[0]
    xf = x.reshape(N, -1).astype(jnp.float32)
    mean = xf.mean(axis=1)
    std = jnp.sqrt(((xf - mean[:, None]) ** 2).sum(axis=1) / (xf.shape[1] - 1))
    shape = (N,) + (1,) * (x.ndim - 1)
    y = (x.astype(jnp.float32) - mean.reshape(shape)) / (std.reshape(shape) + eps)
    gshape = (1, -1) + (1,) * (x.ndim - 2)
    return y * gamma.reshape(gshape) + beta.reshape(gshape)


if __name__ == "__main__":
    key = jax.random.PRNGKey(0)
    kx1, kg1, kx2, kg2, kx3, kg3, kx4 = jax.random.split(key, 7)

    # Case 1: small ContentEncoder-style feature map -> packed single-pass kernel
    # (C=4 folded to an (8,128) layout; grid of 2 'parallel' steps). Nonzero mean
    # exercises the two-pass in-VMEM statistics.
    N, C, H, W = 2, 4, 16, 16
    x = jax.random.normal(kx1, (N, C, H, W), dtype=jnp.float32) + 3.0
    g1 = jax.random.uniform(kg1, (C,), dtype=jnp.float32)     # ~ torch .uniform_()
    b1 = jnp.zeros((C,), dtype=jnp.float32)
    out = jax.block_until_ready(layer_norm(x, g1, b1))
    ref = layer_norm_ref(x, g1, b1)
    assert out.shape == (N, C, H, W)
    assert jnp.allclose(out, ref, atol=5e-5, rtol=5e-5), "packed path mismatch"

    # Case 2: force the chunked two-pass path (what oversized feature maps use) by
    # shrinking the block budget; exercises the (batch-tiles x chunks) grid + Chan.
    N2, C2, H2, W2 = 2, 8, 16, 32
    x2 = jax.random.normal(kx2, (N2, C2, H2, W2), dtype=jnp.float32) - 2.0
    g2 = jax.random.uniform(kg2, (C2,), dtype=jnp.float32)
    b2 = 0.1 * jax.random.uniform(kg1, (C2,), dtype=jnp.float32)
    out2 = jax.block_until_ready(layer_norm(x2, g2, b2, max_block_bytes=8 * 1024))
    ref2 = layer_norm_ref(x2, g2, b2)
    assert out2.shape == (N2, C2, H2, W2)
    assert jnp.allclose(out2, ref2, atol=5e-5, rtol=5e-5), "chunked path mismatch"

    # Case 3: chunked path with HW not a multiple of 128 (ragged lane chunk + mask).
    N3, C3, H3, W3 = 2, 16, 20, 20
    x3 = jax.random.normal(kx3, (N3, C3, H3, W3), dtype=jnp.float32) * 0.5 + 1.5
    g3 = jax.random.uniform(kg3, (C3,), dtype=jnp.float32)
    b3 = 0.05 * jnp.ones((C3,), dtype=jnp.float32)
    out3 = jax.block_until_ready(layer_norm(x3, g3, b3, max_block_bytes=8 * 1024))
    ref3 = layer_norm_ref(x3, g3, b3)
    assert out3.shape == (N3, C3, H3, W3)
    assert jnp.allclose(out3, ref3, atol=5e-5, rtol=5e-5), "ragged chunked mismatch"

    # Case 4: packed path with N=3, B=2 (ragged batch tile; B no longer must divide N).
    N4, C4, H4, W4 = 3, 5, 12, 25
    x4 = jax.random.normal(kx4, (N4, C4, H4, W4), dtype=jnp.float32)
    g4 = jax.random.uniform(kg1, (C4,), dtype=jnp.float32)
    b4 = jnp.zeros((C4,), dtype=jnp.float32)
    out4 = jax.block_until_ready(layer_norm(x4, g4, b4, max_block_bytes=32 * 1024))
    ref4 = layer_norm_ref(x4, g4, b4)
    assert out4.shape == (N4, C4, H4, W4)
    assert jnp.allclose(out4, ref4, atol=5e-5, rtol=5e-5), "ragged-batch packed mismatch"

    print("KERNEL_OK")
</pallas_src>

<mosaic_0001>
module attributes {stable_mosaic.version = 11 : i64} {
  func.func @_ln_fused_kernel(%arg0: i32, %arg1: memref<1x8x128xf32, #tpu.memory_space<vmem>>, %arg2: memref<8x1xf32, #tpu.memory_space<vmem>>, %arg3: memref<8x1xf32, #tpu.memory_space<vmem>>, %arg4: memref<1x8x128xf32, #tpu.memory_space<vmem>>) attributes {dimension_semantics = [#tpu.dimension_semantics<parallel>], iteration_bounds = array<i64: 2>, scalar_prefetch = 0 : i64, scratch_operands = 0 : i64, tpu.core_type = #tpu.core_type<tc>, window_params = [{transform_indices = @transform_0, window_bounds = array<i64: 1, 8, 128>}, {pipeline_mode = #tpu.pipeline_mode<synchronous>, transform_indices = @transform_1, window_bounds = array<i64: 8, 1>}, {pipeline_mode = #tpu.pipeline_mode<synchronous>, transform_indices = @transform_2, window_bounds = array<i64: 8, 1>}, {transform_indices = @transform_3, window_bounds = array<i64: 1, 8, 128>}]} {
    %c0 = arith.constant 0 : index
    %c0_0 = arith.constant 0 : index
    %c0_1 = arith.constant 0 : index
    %0 = vector.load %arg1[%c0, %c0_0, %c0_1] : memref<1x8x128xf32, #tpu.memory_space<vmem>>, vector<1x8x128xf32>
    %cst = arith.constant dense<0.000000e+00> : vector<1x8xf32>
    %1 = vector.multi_reduction <add>, %0, %cst [2] : vector<1x8x128xf32> to vector<1x8xf32>
    %2 = vector.shape_cast %1 : vector<1x8xf32> to vector<1x8x1xf32>
    %cst_2 = arith.constant dense<0.000000e+00> : vector<1x1xf32>
    %3 = vector.multi_reduction <add>, %2, %cst_2 [1] : vector<1x8x1xf32> to vector<1x1xf32>
    %4 = vector.shape_cast %3 : vector<1x1xf32> to vector<1x1x1xf32>
    %cst_3 = arith.constant 9.765625E-4 : f32
    %5 = vector.broadcast %cst_3 : f32 to vector<1x1x1xf32>
    %6 = arith.mulf %4, %5 : vector<1x1x1xf32>
    %7 = vector.broadcast %6 : vector<1x1x1xf32> to vector<1x8x128xf32>
    %8 = arith.subf %0, %7 : vector<1x8x128xf32>
    %9 = arith.mulf %8, %8 : vector<1x8x128xf32>
    %cst_4 = arith.constant dense<0.000000e+00> : vector<1x8xf32>
    %10 = vector.multi_reduction <add>, %9, %cst_4 [2] : vector<1x8x128xf32> to vector<1x8xf32>
    %11 = vector.shape_cast %10 : vector<1x8xf32> to vector<1x8x1xf32>
    %cst_5 = arith.constant dense<0.000000e+00> : vector<1x1xf32>
    %12 = vector.multi_reduction <add>, %11, %cst_5 [1] : vector<1x8x1xf32> to vector<1x1xf32>
    %13 = vector.shape_cast %12 : vector<1x1xf32> to vector<1x1x1xf32>
    %cst_6 = arith.constant 9.77517105E-4 : f32
    %14 = vector.broadcast %cst_6 : f32 to vector<1x1x1xf32>
    %15 = arith.mulf %13, %14 : vector<1x1x1xf32>
    %cst_7 = arith.constant 0.000000e+00 : f32
    %16 = vector.broadcast %cst_7 : f32 to vector<1x1x1xf32>
    %17 = arith.maximumf %15, %16 : vector<1x1x1xf32>
    %18 = math.sqrt %17 : vector<1x1x1xf32>
    %cst_8 = arith.constant 9.99999974E-6 : f32
    %19 = vector.broadcast %cst_8 : f32 to vector<1x1x1xf32>
    %20 = arith.addf %18, %19 : vector<1x1x1xf32>
    %cst_9 = arith.constant 1.000000e+00 : f32
    %21 = vector.broadcast %cst_9 : f32 to vector<1x1x1xf32>
    %22 = arith.divf %21, %20 : vector<1x1x1xf32>
    %c0_10 = arith.constant 0 : index
    %c0_11 = arith.constant 0 : index
    %23 = vector.load %arg2[%c0_10, %c0_11] : memref<8x1xf32, #tpu.memory_space<vmem>>, vector<8x1xf32>
    %24 = vector.shape_cast %23 : vector<8x1xf32> to vector<1x8x1xf32>
    %c0_12 = arith.constant 0 : index
    %c0_13 = arith.constant 0 : index
    %25 = vector.load %arg3[%c0_12, %c0_13] : memref<8x1xf32, #tpu.memory_space<vmem>>, vector<8x1xf32>
    %26 = vector.shape_cast %25 : vector<8x1xf32> to vector<1x8x1xf32>
    %27 = vector.broadcast %22 : vector<1x1x1xf32> to vector<1x8x1xf32>
    %28 = arith.mulf %24, %27 : vector<1x8x1xf32>
    %29 = vector.broadcast %28 : vector<1x8x1xf32> to vector<1x8x128xf32>
    %30 = arith.mulf %8, %29 : vector<1x8x128xf32>
    %31 = vector.broadcast %26 : vector<1x8x1xf32> to vector<1x8x128xf32>
    %32 = arith.addf %30, %31 : vector<1x8x128xf32>
    %c0_14 = arith.constant 0 : index
    %c0_15 = arith.constant 0 : index
    %c0_16 = arith.constant 0 : index
    %33 = vector.load %arg4[%c0_14, %c0_15, %c0_16] : memref<1x8x128xf32, #tpu.memory_space<vmem>>, vector<1x8x128xf32>
    tpu.vector_store %arg4[%c0_14, %c0_15, %c0_16], %32 {strides = array<i32>} : memref<1x8x128xf32, #tpu.memory_space<vmem>>, vector<1x8x128xf32>,
    return
  }
  func.func @transform_0(%arg0: i32) -> (i32, i32, i32) {
    %c0_i32 = arith.constant 0 : i32
    %c0_i32_0 = arith.constant 0 : i32
    %c0_i32_1 = arith.constant 0 : i32
    return %arg0, %c0_i32, %c0_i32_0 : i32, i32, i32
  }
  func.func @transform_1(%arg0: i32) -> (i32, i32) {
    %c0_i32 = arith.constant 0 : i32
    %c0_i32_0 = arith.constant 0 : i32
    %c0_i32_1 = arith.constant 0 : i32
    return %c0_i32, %c0_i32_0 : i32, i32
  }
  func.func @transform_2(%arg0: i32) -> (i32, i32) {
    %c0_i32 = arith.constant 0 : i32
    %c0_i32_0 = arith.constant 0 : i32
    %c0_i32_1 = arith.constant 0 : i32
    return %c0_i32, %c0_i32_0 : i32, i32
  }
  func.func @transform_3(%arg0: i32) -> (i32, i32, i32) {
    %c0_i32 = arith.constant 0 : i32
    %c0_i32_0 = arith.constant 0 : i32
    %c0_i32_1 = arith.constant 0 : i32
    return %arg0, %c0_i32, %c0_i32_0 : i32, i32, i32
  }
}

</mosaic_0001>

<llo_original>
// kernel: tpu_custom_call.1
$region0: #{tpu_custom_call.1}
  #allocation0 [shape = 'u32[]', space=smem, size = 0x4, offset = 0x4, fixed_abs, tag = 'smem constant byte address 0x4 - core index']
  #allocation1 [shape = 'u32[72,128]{1,0:T(1,128)}', space=vmem, size = 0x9000, scoped, tag = 'internal scratch']
  %s0 = inlined_call_operand.vmem [shape: f32[2,8,128], index: 0, kind: input, shape index: {}]
  %s1 = inlined_call_operand.vmem [shape: f32[8,1], index: 1, kind: input, shape index: {}]
  %s2 = inlined_call_operand.vmem [shape: f32[8,1], index: 2, kind: input, shape index: {}]
  %s3 = inlined_call_operand.hbm [shape: f32[2,8,128], index: 3, kind: output, shape index: {}]
  %s4 = sld [smem:[#allocation0]]
  $region45: #{tpu_custom_call.1} parent=0
    _
  %s6 = ssub.s32 1, %s4
  %s7 = scalar_select 0, %s6, %s4
  $region1: #{tpu_custom_call.1} parent=0
    #allocation2 [shape = 'u8[8192]{0}', space=vmem, size = 0x2000, scoped, tag = 'output window, operand 0']
    #allocation3 [shape = 's32[2]{0}', space=sflag, size = 0x8, scoped, tag = 'scoped memory for tpu_custom_call.1']
    %8 = vsyncpa [#allocation3], 0
    %s9 = scalar_lea.sflag [#allocation3], 1
    %10 = vsyncpa %s9, 0
    loop: start=0, step=1, limit=4
    $region2: #{tpu_custom_call.1} parent=1 // loop_pre_header
      _
    $region3: #{tpu_custom_call.1} parent=1 // loop_header
      %s12 = sphi 0, %s16
      %p13 = scmp.ge.s32.totalorder %s12, 4
      %s22 = sphi 0, %s24
      %s25 = sphi 0, %s22
      %s26 = sphi 0, %s25
      %s42 = sphi 0, %s26
      %s46 = sphi 0, %s46
      %s48 = sphi 0, %s46
      %s49 = sphi 0, %s48
      %s63 = sphi 0, %s49
      %s67 = sphi 0, %s67
      %s69 = sphi 0, %s67
      %s70 = sphi 0, %s69
      %s84 = sphi 0, %s70
      %s90 = sphi 0, %s92
      %s93 = sphi 0, %s90
      %s94 = sphi 0, %s93
      %s110 = sphi 0, %s94
    $region4: #{tpu_custom_call.1} parent=1 // loop_header_branch
      %15 = sbr.rel (%p13) target = $region8
    $region5: #{tpu_custom_call.1} parent=1 // loop_body
      %s17 = ssub.s32 %s12, 1
      %s18 = ssub.s32 %s12, 2
      %s19 = sadd.s32 %s12, 1
      %s20 = ssub.s32 %s12, %s19
      %p21 = scmp.eq.s32.totalorder %s20, 0
      %s23 = sadd.s32 %s22, 1
      %s24 = scalar_select %p21, %s22, %s23
      %p27 = pneg %p21
      %p28 = scmp.eq.s32.totalorder %s12, 1
      %p29 = por %p27, %p28
      %p30 = scmp.ne.s32.totalorder %s22, %s25
      %p31 = scmp.eq.s32.totalorder %s12, 0
      %p32 = por %p30, %p31
      %p33 = scmp.ne.s32.totalorder %s22, %s25
      %p34 = scmp.eq.s32.totalorder %s17, 1
      %p35 = por %p33, %p34
      %p36 = scmp.ne.s32.totalorder %s25, %s26
      %p37 = scmp.eq.s32.totalorder %s17, 0
      %p38 = por %p36, %p37
      %p39 = scmp.ne.s32.totalorder %s25, %s26
      %p40 = scmp.eq.s32.totalorder %s18, 1
      %p41 = por %p39, %p40
      %p43 = scmp.ne.s32.totalorder %s26, %s42
      %p44 = scmp.eq.s32.totalorder %s18, 0
      %p45 = por %p43, %p44
      %s47 = sadd.s32 %s46, 1
      %p50 = scmp.eq.s32.totalorder %s12, 1
      %p51 = scmp.ne.s32.totalorder %s46, %s48
      %p52 = scmp.eq.s32.totalorder %s12, 0
      %p53 = por %p51, %p52
      %p54 = scmp.ne.s32.totalorder %s46, %s48
      %p55 = scmp.eq.s32.totalorder %s17, 1
      %p56 = por %p54, %p55
      %p57 = scmp.ne.s32.totalorder %s48, %s49
      %p58 = scmp.eq.s32.totalorder %s17, 0
      %p59 = por %p57, %p58
      %p60 = scmp.ne.s32.totalorder %s48, %s49
      %p61 = scmp.eq.s32.totalorder %s18, 1
      %p62 = por %p60, %p61
      %p64 = scmp.ne.s32.totalorder %s49, %s63
      %p65 = scmp.eq.s32.totalorder %s18, 0
      %p66 = por %p64, %p65
      %s68 = sadd.s32 %s67, 1
      %p71 = scmp.eq.s32.totalorder %s12, 1
      %p72 = scmp.ne.s32.totalorder %s67, %s69
      %p73 = scmp.eq.s32.totalorder %s12, 0
      %p74 = por %p72, %p73
      %p75 = scmp.ne.s32.totalorder %s67, %s69
      %p76 = scmp.eq.s32.totalorder %s17, 1
      %p77 = por %p75, %p76
      %p78 = scmp.ne.s32.totalorder %s69, %s70
      %p79 = scmp.eq.s32.totalorder %s17, 0
      %p80 = por %p78, %p79
      %p81 = scmp.ne.s32.totalorder %s69, %s70
      %p82 = scmp.eq.s32.totalorder %s18, 1
      %p83 = por %p81, %p82
      %p85 = scmp.ne.s32.totalorder %s70, %s84
      %p86 = scmp.eq.s32.totalorder %s18, 0
      %p87 = por %p85, %p86
      %s88 = ssub.s32 %s12, %s19
      %p89 = scmp.eq.s32.totalorder %s88, 0
      %s91 = sadd.s32 %s90, 1
      %s92 = scalar_select %p89, %s90, %s91
      %p95 = pneg %p89
      %p96 = scmp.eq.s32.totalorder %s12, 1
      %p97 = por %p95, %p96
      %p98 = scmp.ne.s32.totalorder %s90, %s93
      %p99 = scmp.eq.s32.totalorder %s12, 0
      %p100 = por %p98, %p99
      %p101 = scmp.ne.s32.totalorder %s90, %s93
      %p102 = scmp.eq.s32.totalorder %s17, 1
      %p103 = por %p101, %p102
      %p104 = scmp.ne.s32.totalorder %s93, %s94
      %p105 = scmp.eq.s32.totalorder %s17, 0
      %p106 = por %p104, %p105
      %p107 = scmp.ne.s32.totalorder %s93, %s94
      %p108 = scmp.eq.s32.totalorder %s18, 1
      %p109 = por %p107, %p108
      %p111 = scmp.ne.s32.totalorder %s94, %s110
      %p112 = scmp.eq.s32.totalorder %s18, 0
      %p113 = por %p111, %p112
      %p114 = scmp.le.s32.totalorder 1, %s12
      %p115 = scmp.lt.s32.totalorder %s12, 3
      %p116 = pnand %p114, %p115
      %p117 = pneg %p116
      // Predicated region
      $region9: #{tpu_custom_call.1} parent=5 // pred_check
        _
      $region10: #{tpu_custom_call.1} parent=5 // pred_check_branch
        %119 = sbr.rel (%p116) target = $region12
      $region11: #{tpu_custom_call.1} parent=5 // pred_region
        %s120 = ssub.s32 %s12, 1
        // Predicated region
        $region13: #{tpu_custom_call.1} parent=11 // pred_check
          %p121 = pneg %p59
        $region14: #{tpu_custom_call.1} parent=11 // pred_check_branch
          %123 = sbr.rel (%p121) target = $region16
        $region15: #{tpu_custom_call.1} parent=11 // pred_region
          _
        $region16: #{tpu_custom_call.1} parent=11 // pred_fallthru
          _
        // Predicated region
        $region17: #{tpu_custom_call.1} parent=11 // pred_check
          %p124 = pneg %p80
        $region18: #{tpu_custom_call.1} parent=11 // pred_check_branch
          %126 = sbr.rel (%p124) target = $region20
        $region19: #{tpu_custom_call.1} parent=11 // pred_region
          _
        $region20: #{tpu_custom_call.1} parent=11 // pred_fallthru
          _
      $region12: #{tpu_custom_call.1} parent=5 // pred_fallthru
        _
      %p127 = scmp.lt.s32.totalorder %s12, 2
      // Predicated region
      $region21: #{tpu_custom_call.1} parent=5 // pred_check
        %p128 = pneg %p127
      $region22: #{tpu_custom_call.1} parent=5 // pred_check_branch
        %130 = sbr.rel (%p128) target = $region24
      $region23: #{tpu_custom_call.1} parent=5 // pred_region
        // Predicated region
        $region25: #{tpu_custom_call.1} parent=23 // pred_check
          %p131 = pneg %p32
        $region26: #{tpu_custom_call.1} parent=23 // pred_check_branch
          %133 = sbr.rel (%p131) target = $region28
        $region27: #{tpu_custom_call.1} parent=23 // pred_region
          %p134 = scmp.lt.s32.totalorder %s12, 1
          %s135 = scalar_select %p134, %s12, 1
          %s136 = smul.addr %s135, 8
          %s137 = scalar_lea.vmem %s0, %s136
        $region28: #{tpu_custom_call.1} parent=23 // pred_fallthru
          _
      $region24: #{tpu_custom_call.1} parent=5 // pred_fallthru
        _
      %p138 = scmp.le.s32.totalorder 1, %s12
      %p139 = scmp.lt.s32.totalorder %s12, 3
      %p140 = pnand %p138, %p139
      %p141 = pneg %p140
      // Predicated region
      $region29: #{tpu_custom_call.1} parent=5 // pred_check
        _
      $region30: #{tpu_custom_call.1} parent=5 // pred_check_branch
        %143 = sbr.rel (%p140) target = $region32
      $region31: #{tpu_custom_call.1} parent=5 // pred_region
        %s144 = ssub.s32 %s12, 1
        %p145 = scmp.lt.s32.totalorder %s17, 1
        %s146 = scalar_select %p145, %s17, 1
        %s147 = smul.addr %s146, 8
        %s148 = scalar_lea.vmem %s0, %s147
        %p149 = pneg %p38
        %p150 = pneg %p35
        %p151 = pneg %p59
        %p152 = pneg %p56
        %p153 = pneg %p80
        %p154 = pneg %p77
        %p155 = pneg %p106
        %p156 = pneg %p103
        %s157 = sand.u32 %s93, 1
        %s158 = scalar_lea.sflag [#allocation3], %s157
        %s159 = sand.u32 %s93, 1
        %s160 = smul.addr %s159, 8
        %s161 = scalar_lea.vmem [#allocation2], %s160
        %p162 = scmp.lt.s32.totalorder %s17, 1
        %s163 = scalar_select %p162, %s17, 1
        %s164 = smul.addr %s163, 8
        %s165 = scalar_lea.vmem %s0, %s164
        %v166 = vld [vmem:[%s165] sm:$0xff]
        %167 = vadd.xlane.f32.xlu0 %v166
        %v168 = vpop.xlane.xlu0 %167
        %v169 = vrot.slane %v168, 4
        %v170 = vadd.f32 %v168, %v169
        %v171 = vrot.slane %v170, 2
        %v172 = vadd.f32 %v170, %v171
        %v173 = vrot.slane %v172, 1
        %v174 = vadd.f32 %v172, %v173
        %v175 = vmul.f32 %v174, 0.0009765625
        %v176 = vsub.f32 %v166, %v175
        %v177 = vmul.f32 %v176, %v176
        %178 = vadd.xlane.f32.xlu0 %v177
        %v179 = vpop.xlane.xlu0 %178
        %v180 = vrot.slane %v179, 4
        %v181 = vadd.f32 %v179, %v180
        %v182 = vrot.slane %v181, 2
        %v183 = vadd.f32 %v181, %v182
        %v184 = vrot.slane %v183, 1
        %v185 = vadd.f32 %v183, %v184
        %v186 = vmul.f32 %v185, 0.0009775171
        %v187 = vmax.f32 %v186, 0.0
        %v188 = vrsqrt.pop %v187
        %v189 = vmul.f32 %v188, %v187
        %v190 = vmul.f32 %v189, %v188
        %v191 = vmul.f32 0.5, %v190
        %v192 = vsub.f32 1.5, %v191
        %v193 = vmul.f32 %v188, %v192
        %v194 = vmul.f32 %v187, %v193
        %vm195 = vcmp.eq.f32.partialorder %v187, inf
        %v196 = vsel %vm195, %v187, %v194
        %vm197 = vcmp.eq.f32.partialorder %v187, 0.0
        %v198 = vand.u32 %v187, 2147483648
        %v199 = vsel %vm197, %v198, %v196
        %v200 = vadd.f32 %v199, 1e-05
        %v201 = vrcp.pop %v200
        %v202 = vmul.f32 %v200, %v201
        %v203 = vsub.f32 1.0, %v202
        %v204 = vmul.f32 %v201, %v203
        %v205 = vadd.f32 %v201, %v204
        %vm206 = vweird.f32 %v200
        %vm207 = vweird.f32 %v201
        %vm208 = vmor %vm206, %vm207
        %v209 = vsel %vm208, %v201, %v205
        %v210 = vand.u32 2147483647, %v200
        %vm211 = vcmp.eq.f32.partialorder %v210, 8.507059e+37
        %v212 = vand.u32 %v200, 2147483648
        %v213 = vor.u32 1.1754944e-38, %v212
        %v214 = vsel %vm211, %v213, %v209
        %v215 = vmul.f32 1.0, %v214
        %v216 = vld [vmem:[%s1] sm:$0xff]
        %v217 = vld [vmem:[%s2] sm:$0xff]
        %v218 = vmul.f32 %v216, %v215
        %220 = vset.pattern.permute.xlu0 0
        %221 = vperm.xlu0 %220, %v218
        %v222 = vpop.permute.xlu0 %221
        %v224 = vmul.f32 %v176, %v222
        %226 = vset.pattern.permute.xlu0 0
        %227 = vperm.xlu0 %226, %v217
        %v228 = vpop.permute.xlu0 %227
        %v230 = vadd.f32 %v224, %v228
        %231 = vst [vmem:[%s161] sm:$0xff] %v230
        %s232 = sand.u32 %s93, 1
        %s233 = scalar_lea.sflag [#allocation3], %s232
        %s234 = sand.u32 %s93, 1
        %s235 = smul.addr %s234, 8
        %s236 = scalar_lea.vmem [#allocation2], %s235
        // Predicated region
        $region33: #{tpu_custom_call.1} parent=31 // pred_check
          %p237 = pneg %p103
        $region34: #{tpu_custom_call.1} parent=31 // pred_check_branch
          %239 = sbr.rel (%p237) target = $region36
        $region35: #{tpu_custom_call.1} parent=31 // pred_region
          %241 = vsyncadd %s233, 0
          %s242 = smul.addr %s17, 8
          %s243 = scalar_lea.hbm %s3, %s242
          %s245 = sshll.u32 %s236, 4
          %s246 = int_to_ptr.vmem [resolvable:$true] %s245
          %s247 = sshll.u32 %s243, 4
          %s248 = int_to_ptr.hbm [resolvable:$true] %s247
          %250 = dma.vmem_to_hbm [thread:$0]  %s246, 128, %s248, %s233
        $region36: #{tpu_custom_call.1} parent=31 // pred_fallthru
          _
      $region32: #{tpu_custom_call.1} parent=5 // pred_fallthru
        _
      %p251 = scmp.le.s32.totalorder 2, %s12
      // Predicated region
      $region37: #{tpu_custom_call.1} parent=5 // pred_check
        %p252 = pneg %p251
      $region38: #{tpu_custom_call.1} parent=5 // pred_check_branch
        %254 = sbr.rel (%p252) target = $region40
      $region39: #{tpu_custom_call.1} parent=5 // pred_region
        %s255 = ssub.s32 %s12, 2
        // Predicated region
        $region41: #{tpu_custom_call.1} parent=39 // pred_check
          %p256 = pneg %p109
        $region42: #{tpu_custom_call.1} parent=39 // pred_check_branch
          %258 = sbr.rel (%p256) target = $region44
        $region43: #{tpu_custom_call.1} parent=39 // pred_region
          %s259 = sand.u32 %s94, 1
          %s260 = scalar_lea.sflag [#allocation3], %s259
          %s261 = sand.u32 %s94, 1
          %s262 = smul.addr %s261, 8
          %s263 = scalar_lea.vmem [#allocation2], %s262
          %265 = dma.done %s260, 128
        $region44: #{tpu_custom_call.1} parent=39 // pred_fallthru
          _
      $region40: #{tpu_custom_call.1} parent=5 // pred_fallthru
        _
    $region6: #{tpu_custom_call.1} parent=1 // loop_footer
      %s16 = sadd.s32 1, %s12
    $region7: #{tpu_custom_call.1} parent=1 // loop_footer_branch
      %11 = sbr.rel target = $region3
    $region8: #{tpu_custom_call.1} parent=1 // loop_exit
      _
    %266 = vsyncpa [#allocation3], 1
    %s267 = scalar_lea.sflag [#allocation3], 1
    %268 = vsyncpa %s267, 1

</llo_original>
